<compile_context>
chip_gen: v7x
topology: tpu7x:2x2x1
jax: 0.10.0
libtpu: 0.0.40
codegen_flags: <defaults>
</compile_context>

<pallas_src>
import jax
import jax.numpy as jnp
from jax.experimental import pallas as pl
from jax.experimental.pallas import tpu as pltpu

IN_FEATURES = 300
OUT_FEATURES = 4
_LANE = 128


def _round_up(n: int, m: int) -> int:
    return ((n + m - 1) // m) * m


def _linear_softmax_kernel(x_ref, w_ref, o_ref):
    # x_ref: (tb, 300) f32, w_ref: (300, 4) bf16, o_ref: (tb, 4) f32
    x = x_ref[...].astype(jnp.bfloat16)          # in-kernel cast; x stays f32 in HBM
    logits = jnp.dot(x, w_ref[...], preferred_element_type=jnp.float32)
    m = jnp.max(logits, axis=1, keepdims=True)   # numerically-stable softmax, all f32
    e = jnp.exp(logits - m)
    denom = jnp.sum(e, axis=1, keepdims=True)
    o_ref[...] = (e / denom).astype(o_ref.dtype)


def net_forward(x: jax.Array, w_t: jax.Array, *, block_b: int = 4096) -> jax.Array:
    """x: (B, 300) f32, w_t: (300, 4) -> (B, 4) f32 softmax probabilities."""
    B = x.shape[0]
    assert x.shape[1] == IN_FEATURES and w_t.shape == (IN_FEATURES, OUT_FEATURES)

    # Batch tile: multiple of 8 sublanes, capped at block_b.  Ragged B is
    # handled by a partial last block (no padding pass over x in HBM).
    tb = min(_round_up(block_b, 8), _round_up(B, 8))
    grid = (pl.cdiv(B, tb),)

    # Weight is tiny (300*4); cast it once in the wrapper, it stays VMEM-resident.
    w = w_t.astype(jnp.bfloat16)

    # Explicit VMEM budget (double-buffered x + out tiles, resident weight,
    # bf16 staging copy of the x tile, plus slack), clamped to stay safe on
    # v7x's 64 MiB physical VMEM per TensorCore.
    x_tile = tb * _round_up(IN_FEATURES, _LANE) * 4
    o_tile = tb * _LANE * 4
    w_tile = _round_up(IN_FEATURES, 8) * _LANE * 2
    vmem_bytes = 2 * (x_tile + o_tile + w_tile) + x_tile // 2 + (2 << 20)
    vmem_limit = int(min(max(vmem_bytes, 16 << 20), 48 << 20))

    cost = pl.CostEstimate(
        flops=2 * B * IN_FEATURES * OUT_FEATURES,
        transcendentals=B * OUT_FEATURES,
        bytes_accessed=B * IN_FEATURES * 4
        + IN_FEATURES * OUT_FEATURES * 2
        + B * OUT_FEATURES * 4,
    )

    return pl.pallas_call(
        _linear_softmax_kernel,
        out_shape=jax.ShapeDtypeStruct((B, OUT_FEATURES), jnp.float32),
        grid_spec=pltpu.PrefetchScalarGridSpec(
            num_scalar_prefetch=0,
            grid=grid,
            in_specs=[
                # x: one batch tile per grid step (double-buffered by Pallas).
                pl.BlockSpec((tb, IN_FEATURES), lambda i: (i, 0)),
                # w: constant block index -> stays resident in VMEM.
                pl.BlockSpec((IN_FEATURES, OUT_FEATURES), lambda i: (0, 0)),
            ],
            out_specs=pl.BlockSpec((tb, OUT_FEATURES), lambda i: (i, 0)),
        ),
        compiler_params=pltpu.CompilerParams(
            dimension_semantics=("parallel",),
            vmem_limit_bytes=vmem_limit,
        ),
        cost_estimate=cost,
    )(x, w)


if __name__ == "__main__":
    key = jax.random.PRNGKey(0)
    k_x, k_w = jax.random.split(key)

    B = 8  # small batch
    x = jax.random.normal(k_x, (B, IN_FEATURES), dtype=jnp.float32)

    # nn.Linear(300, 4, bias=False)-style init: uniform(-1/sqrt(300), 1/sqrt(300)).
    bound = 1.0 / (IN_FEATURES ** 0.5)
    w = jax.random.uniform(
        k_w, (OUT_FEATURES, IN_FEATURES), dtype=jnp.float32, minval=-bound, maxval=bound
    )
    w_t = w.T  # (300, 4) so that x @ w_t == x @ W.T

    out = jax.block_until_ready(net_forward(x, w_t))
    assert out.shape == (B, OUT_FEATURES)
    assert bool(jnp.all(jnp.isfinite(out))), "non-finite output"

    # 1) Matched-precision reference: bf16 MXU inputs, f32 accumulation + f32 softmax.
    logits_match = jnp.dot(
        x.astype(jnp.bfloat16), w_t.astype(jnp.bfloat16),
        preferred_element_type=jnp.float32,
    )
    ref_match = jax.nn.softmax(logits_match, axis=1)
    assert jnp.allclose(out, ref_match, atol=2e-3, rtol=2e-3), "mismatch vs matched-precision reference"

    # 2) Full-f32 reference (PyTorch semantics); loose tolerance covers the bf16 MXU inputs.
    logits_f32 = jnp.dot(x, w_t, precision=jax.lax.Precision.HIGHEST)
    ref_f32 = jax.nn.softmax(logits_f32, axis=1)
    assert jnp.allclose(out, ref_f32, atol=2.5e-2, rtol=2.5e-2), "mismatch vs f32 reference"

    # 3) Rows are (exactly-normalized) probabilities.
    assert jnp.allclose(jnp.sum(out, axis=1), 1.0, atol=1e-3), "rows must sum to 1"

    # 4) Ragged batch (B not a multiple of 8) exercising the partial-last-block path.
    B2 = 10
    x2 = jax.random.normal(jax.random.PRNGKey(1), (B2, IN_FEATURES), dtype=jnp.float32)
    out2 = jax.block_until_ready(net_forward(x2, w_t))
    ref2 = jax.nn.softmax(
        jnp.dot(x2.astype(jnp.bfloat16), w_t.astype(jnp.bfloat16),
                preferred_element_type=jnp.float32),
        axis=1,
    )
    assert out2.shape == (B2, OUT_FEATURES)
    assert bool(jnp.all(jnp.isfinite(out2))), "non-finite ragged output"
    assert jnp.allclose(out2, ref2, atol=2e-3, rtol=2e-3), "ragged-batch mismatch vs reference"

    print("KERNEL_OK")
</pallas_src>

<mosaic_0001>
module attributes {stable_mosaic.version = 11 : i64} {
  func.func @_linear_softmax_kernel(%arg0: i32, %arg1: memref<8x300xf32, #tpu.memory_space<vmem>>, %arg2: memref<300x4xbf16, #tpu.memory_space<vmem>>, %arg3: memref<8x4xf32, #tpu.memory_space<vmem>>) attributes {dimension_semantics = [#tpu.dimension_semantics<parallel>], iteration_bounds = array<i64: 1>, scalar_prefetch = 0 : i64, scratch_operands = 0 : i64, tpu.core_type = #tpu.core_type<tc>, window_params = [{transform_indices = @transform_0, window_bounds = array<i64: 8, 300>}, {pipeline_mode = #tpu.pipeline_mode<synchronous>, transform_indices = @transform_1, window_bounds = array<i64: 300, 4>}, {transform_indices = @transform_2, window_bounds = array<i64: 8, 4>}]} {
    %c0 = arith.constant 0 : index
    %c0_0 = arith.constant 0 : index
    %0 = vector.load %arg1[%c0, %c0_0] : memref<8x300xf32, #tpu.memory_space<vmem>>, vector<8x300xf32>
    %1 = arith.truncf %0 : vector<8x300xf32> to vector<8x300xbf16>
    %c0_1 = arith.constant 0 : index
    %c0_2 = arith.constant 0 : index
    %2 = vector.load %arg2[%c0_1, %c0_2] : memref<300x4xbf16, #tpu.memory_space<vmem>>, vector<300x4xbf16>
    %cst = arith.constant dense<0.000000e+00> : vector<8x4xf32>
    %3 = tpu.matmul %1, %2, %cst {dimension_numbers = #tpu.dot_dimension_numbers<[1], [0], [0], [1], [0, 0, 1, 1], [], []>} : vector<8x300xbf16>, vector<300x4xbf16>, vector<8x4xf32> -> vector<8x4xf32>
    %cst_3 = arith.constant dense<0xFF800000> : vector<8xf32>
    %4 = vector.multi_reduction <maximumf>, %3, %cst_3 [1] : vector<8x4xf32> to vector<8xf32>
    %5 = vector.shape_cast %4 : vector<8xf32> to vector<8x1xf32>
    %6 = vector.broadcast %5 : vector<8x1xf32> to vector<8x4xf32>
    %7 = arith.subf %3, %6 : vector<8x4xf32>
    %8 = math.exp %7 : vector<8x4xf32>
    %cst_4 = arith.constant dense<0.000000e+00> : vector<8xf32>
    %9 = vector.multi_reduction <add>, %8, %cst_4 [1] : vector<8x4xf32> to vector<8xf32>
    %10 = vector.shape_cast %9 : vector<8xf32> to vector<8x1xf32>
    %11 = vector.broadcast %10 : vector<8x1xf32> to vector<8x4xf32>
    %12 = arith.divf %8, %11 : vector<8x4xf32>
    %c0_5 = arith.constant 0 : index
    %c0_6 = arith.constant 0 : index
    %13 = vector.load %arg3[%c0_5, %c0_6] : memref<8x4xf32, #tpu.memory_space<vmem>>, vector<8x4xf32>
    tpu.vector_store %arg3[%c0_5, %c0_6], %12 {strides = array<i32>} : memref<8x4xf32, #tpu.memory_space<vmem>>, vector<8x4xf32>,
    return
  }
  func.func @transform_0(%arg0: i32) -> (i32, i32) {
    %c0_i32 = arith.constant 0 : i32
    %c0_i32_0 = arith.constant 0 : i32
    return %arg0, %c0_i32 : i32, i32
  }
  func.func @transform_1(%arg0: i32) -> (i32, i32) {
    %c0_i32 = arith.constant 0 : i32
    %c0_i32_0 = arith.constant 0 : i32
    %c0_i32_1 = arith.constant 0 : i32
    return %c0_i32, %c0_i32_0 : i32, i32
  }
  func.func @transform_2(%arg0: i32) -> (i32, i32) {
    %c0_i32 = arith.constant 0 : i32
    %c0_i32_0 = arith.constant 0 : i32
    return %arg0, %c0_i32 : i32, i32
  }
}

</mosaic_0001>

<llo_original>
// kernel: tpu_custom_call.1
$region0: #{tpu_custom_call.1}
  #allocation0 [shape = 'u32[]', space=smem, size = 0x4, offset = 0x4, fixed_abs, tag = 'smem constant byte address 0x4 - core index']
  #allocation1 [shape = 'u32[144,128]{1,0:T(1,128)}', space=vmem, size = 0x12000, scoped, tag = 'internal scratch']
  %s0 = inlined_call_operand.vmem [shape: f32[8,300], index: 0, kind: input, shape index: {}]
  %s1 = inlined_call_operand.vmem [shape: bf16[300,4], index: 1, kind: input, shape index: {}]
  %s2 = inlined_call_operand.vmem [shape: f32[8,4], index: 2, kind: output, shape index: {}]
  %s3 = sld [smem:[#allocation0]]
  $region18: #{tpu_custom_call.1} parent=0
    _
  %s5 = ssub.s32 1, %s3
  %s6 = scalar_select 0, %s5, %s3
  // Predicated region
  $region2: #{tpu_custom_call.1} parent=0 // pred_check
    _
  $region3: #{tpu_custom_call.1} parent=0 // pred_check_branch
    %8 = sbr.rel (0) target = $region5
  $region4: #{tpu_custom_call.1} parent=0 // pred_region
    _
  $region5: #{tpu_custom_call.1} parent=0 // pred_fallthru
    _
  // Predicated region
  $region6: #{tpu_custom_call.1} parent=0 // pred_check
    _
  $region7: #{tpu_custom_call.1} parent=0 // pred_check_branch
    %10 = sbr.rel (0) target = $region9
  $region8: #{tpu_custom_call.1} parent=0 // pred_region
    _
  $region9: #{tpu_custom_call.1} parent=0 // pred_fallthru
    _
  %v12 = vld [vmem:[%s0] sm:$0xff]
  %v13 = vld [vmem:[%s0 + $0x8] sm:$0xff]
  %v14 = vld [vmem:[%s0 + $0x10] sm:$0xff]
  %v15 = vpack.c.bf16 %v12, %v12
  %v16 = vpack.c.bf16 %v13, %v13
  %v17 = vpack.c.bf16 %v14, %v14
  %v18 = vld [vmem:[%s1] sm:$0xf]
  %v19 = vld [vmem:[%s1 + $0x4] sm:$0xf]
  %v20 = vld [vmem:[%s1 + $0x8] sm:$0xf]
  %v21 = vld [vmem:[%s1 + $0xc] sm:$0xf]
  %v22 = vld [vmem:[%s1 + $0x10] sm:$0xf]
  %v23 = vld [vmem:[%s1 + $0x14] sm:$0xf]
  %v24 = vld [vmem:[%s1 + $0x18] sm:$0xf]
  %v25 = vld [vmem:[%s1 + $0x1c] sm:$0xf]
  %v26 = vld [vmem:[%s1 + $0x20] sm:$0xf]
  %v27 = vld [vmem:[%s1 + $0x24] sm:$0xf]
  %v28 = vld [vmem:[%s1 + $0x28] sm:$0xf]
  %v29 = vld [vmem:[%s1 + $0x2c] sm:$0xf]
  %v30 = vld [vmem:[%s1 + $0x30] sm:$0xf]
  %v31 = vld [vmem:[%s1 + $0x34] sm:$0xf]
  %v32 = vld [vmem:[%s1 + $0x38] sm:$0xf]
  %v33 = vld [vmem:[%s1 + $0x3c] sm:$0xf]
  %v34 = vld [vmem:[%s1 + $0x40] sm:$0xf]
  %v35 = vld [vmem:[%s1 + $0x44] sm:$0xf]
  %v36 = vld [vmem:[%s1 + $0x48] sm:$0xf]
  %v37 = vld [vmem:[%s1 + $0x4c] sm:$0xf]
  %v38 = vld [vmem:[%s1 + $0x50] sm:$0xf]
  %v39 = vld [vmem:[%s1 + $0x54] sm:$0xf]
  %v40 = vld [vmem:[%s1 + $0x58] sm:$0xf]
  %v41 = vld [vmem:[%s1 + $0x5c] sm:$0xf]
  %v42 = vld [vmem:[%s1 + $0x60] sm:$0xf]
  %v43 = vld [vmem:[%s1 + $0x64] sm:$0xf]
  %v44 = vld [vmem:[%s1 + $0x68] sm:$0xf]
  %v45 = vld [vmem:[%s1 + $0x6c] sm:$0xf]
  %v46 = vld [vmem:[%s1 + $0x70] sm:$0xf]
  %v47 = vld [vmem:[%s1 + $0x74] sm:$0xf]
  %v48 = vld [vmem:[%s1 + $0x78] sm:$0xf]
  %v49 = vld [vmem:[%s1 + $0x7c] sm:$0xf]
  %v50 = vld [vmem:[%s1 + $0x80] sm:$0xf]
  %v51 = vld [vmem:[%s1 + $0x84] sm:$0xf]
  %v52 = vld [vmem:[%s1 + $0x88] sm:$0xf]
  %v53 = vld [vmem:[%s1 + $0x8c] sm:$0xf]
  %v54 = vld [vmem:[%s1 + $0x90] sm:$0xf]
  %v55 = vld [vmem:[%s1 + $0x94] sm:$0x3]
  %v94 = vunpack.c.l.b16 %v18
  %v95 = vunpack.c.l.b16 %v19
  %v96 = vunpack.c.l.b16 %v20
  %v97 = vunpack.c.l.b16 %v21
  %v98 = vunpack.c.l.b16 %v22
  %v99 = vunpack.c.l.b16 %v23
  %v100 = vunpack.c.l.b16 %v24
  %v101 = vunpack.c.l.b16 %v25
  %v102 = vunpack.c.l.b16 %v26
  %v103 = vunpack.c.l.b16 %v27
  %v104 = vunpack.c.l.b16 %v28
  %v105 = vunpack.c.l.b16 %v29
  %v106 = vunpack.c.l.b16 %v30
  %v107 = vunpack.c.l.b16 %v31
  %v108 = vunpack.c.l.b16 %v32
  %v109 = vunpack.c.l.b16 %v33
  %v110 = vunpack.c.l.b16 %v34
  %v111 = vunpack.c.l.b16 %v35
  %v112 = vunpack.c.l.b16 %v36
  %v113 = vunpack.c.l.b16 %v37
  %v114 = vunpack.c.l.b16 %v38
  %v115 = vunpack.c.l.b16 %v39
  %v116 = vunpack.c.l.b16 %v40
  %v117 = vunpack.c.l.b16 %v41
  %v118 = vunpack.c.l.b16 %v42
  %v119 = vunpack.c.l.b16 %v43
  %v120 = vunpack.c.l.b16 %v44
  %v121 = vunpack.c.l.b16 %v45
  %v122 = vunpack.c.l.b16 %v46
  %v123 = vunpack.c.l.b16 %v47
  %v124 = vunpack.c.l.b16 %v48
  %v125 = vunpack.c.l.b16 %v49
  %v126 = vunpack.c.l.b16 %v50
  %v127 = vunpack.c.l.b16 %v51
  %v128 = vunpack.c.l.b16 %v52
  %v129 = vunpack.c.l.b16 %v53
  %v130 = vunpack.c.l.b16 %v54
  %v131 = vunpack.c.l.b16 %v55
  %v132 = vpack.c.b16 %v95, %v94
  %v133 = vpack.c.b16 %v97, %v96
  %v134 = vpack.c.b16 %v99, %v98
  %v135 = vpack.c.b16 %v101, %v100
  %v136 = vpack.c.b16 %v103, %v102
  %v137 = vpack.c.b16 %v105, %v104
  %v138 = vpack.c.b16 %v107, %v106
  %v139 = vpack.c.b16 %v109, %v108
  %v140 = vpack.c.b16 %v111, %v110
  %v141 = vpack.c.b16 %v113, %v112
  %v142 = vpack.c.b16 %v115, %v114
  %v143 = vpack.c.b16 %v117, %v116
  %v144 = vpack.c.b16 %v119, %v118
  %v145 = vpack.c.b16 %v121, %v120
  %v146 = vpack.c.b16 %v123, %v122
  %v147 = vpack.c.b16 %v125, %v124
  %v148 = vpack.c.b16 %v127, %v126
  %v149 = vpack.c.b16 %v129, %v128
  %v150 = vpack.c.b16 %v131, %v130
  %vm169 = vcmask 359424
  %v171 = vsel %vm169, %v17, 0
  %vm173 = vcmask 1045504
  %v175 = vsel %vm173, %v150, 0
  %177 = vmatprep.subr.bf16.mxu0 0
  %178 = vmatpush1.bf16.msra.mxu0 %v132
  %179 = vmatprep.subr.bf16.mxu0 0
  %180 = vmatpush1.bf16.msra.mxu0 %v133
  %181 = vmatprep.subr.bf16.mxu0 0
  %182 = vmatpush1.bf16.msra.mxu0 %v134
  %183 = vmatprep.subr.bf16.mxu0 0
  %184 = vmatpush1.bf16.msra.mxu0 %v135
  %185 = vmatprep.subr.bf16.mxu0 0
  %186 = vmatpush1.bf16.msra.mxu0 %v136
  %187 = vmatprep.subr.bf16.mxu0 0
  %188 = vmatpush1.bf16.msra.mxu0 %v137
  %189 = vmatprep.subr.bf16.mxu0 0
  %190 = vmatpush1.bf16.msra.mxu0 %v138
  %191 = vmatprep.subr.bf16.mxu0 0
  %192 = vmatpush1.bf16.msra.mxu0 %v139
  %193 = vmatprep.subr.bf16.mxu0 0
  %194 = vmatpush1.bf16.msra.mxu0 %v140
  %195 = vmatprep.subr.bf16.mxu0 0
  %196 = vmatpush1.bf16.msra.mxu0 %v141
  %197 = vmatprep.subr.bf16.mxu0 0
  %198 = vmatpush1.bf16.msra.mxu0 %v142
  %199 = vmatprep.subr.bf16.mxu0 0
  %200 = vmatpush1.bf16.msra.mxu0 %v143
  %201 = vmatprep.subr.bf16.mxu0 0
  %202 = vmatpush1.bf16.msra.mxu0 %v144
  %203 = vmatprep.subr.bf16.mxu0 0
  %204 = vmatpush1.bf16.msra.mxu0 %v145
  %205 = vmatprep.subr.bf16.mxu0 0
  %206 = vmatpush1.bf16.msra.mxu0 %v146
  %207 = vmatprep.subr.bf16.mxu0 0
  %208 = vmatpush1.bf16.msra.mxu0 %v147
  %209 = vmatprep.mubr.bf16.mxu0 %v16
  %210 = vmatmul.mubr.bf16.gmra.mrb[0].mxu0 %v15
  %v211 = vpop.f32.mrb[0].mxu0
  %v212 = vadd.f32 0.0, %v211
  %v213 = vpop.f32.mrb[0].mxu0
  %v214 = vpop.f32.mrb[0].mxu0
  %v215 = vpop.f32.mrb[0].mxu0
  %216 = vdwg.mxu0
  %217 = vmatprep.subr.bf16.mxu0 0
  %218 = vmatpush1.bf16.msra.mxu0 %v148
  %219 = vmatprep.subr.bf16.mxu0 0
  %220 = vmatpush1.bf16.msra.mxu0 %v149
  %221 = vmatprep.subr.bf16.mxu0 0
  %222 = vmatpush1.bf16.msra.mxu0 %v175
  %223 = vmatprep.subr.bf16.mxu0 0
  %224 = vmatpush1.bf16.msra.mxu0 0
  %225 = vmatprep.subr.bf16.mxu0 0
  %226 = vmatpush1.bf16.msra.mxu0 0
  %227 = vmatprep.subr.bf16.mxu0 0
  %228 = vmatpush1.bf16.msra.mxu0 0
  %229 = vmatprep.subr.bf16.mxu0 0
  %230 = vmatpush1.bf16.msra.mxu0 0
  %231 = vmatprep.subr.bf16.mxu0 0
  %232 = vmatpush1.bf16.msra.mxu0 0
  %233 = vmatprep.subr.bf16.mxu0 0
  %234 = vmatpush1.bf16.msra.mxu0 0
  %235 = vmatprep.subr.bf16.mxu0 0
  %236 = vmatpush1.bf16.msra.mxu0 0
  %237 = vmatprep.subr.bf16.mxu0 0
  %238 = vmatpush1.bf16.msra.mxu0 0
  %239 = vmatprep.subr.bf16.mxu0 0
  %240 = vmatpush1.bf16.msra.mxu0 0
  %241 = vmatprep.subr.bf16.mxu0 0
  %242 = vmatpush1.bf16.msra.mxu0 0
  %243 = vmatprep.subr.bf16.mxu0 0
  %244 = vmatpush1.bf16.msra.mxu0 0
  %245 = vmatprep.subr.bf16.mxu0 0
  %246 = vmatpush1.bf16.msra.mxu0 0
  %247 = vmatprep.subr.bf16.mxu0 0
  %248 = vmatpush1.bf16.msra.mxu0 0
  %249 = vmatprep.mubr.bf16.mxu0 0
  %250 = vmatmul.mubr.bf16.gmra.mrb[0].mxu0 %v171
  %v251 = vpop.f32.mrb[0].mxu0
  %v252 = vadd.f32 %v212, %v251
  %v253 = vpop.f32.mrb[0].mxu0
  %v254 = vpop.f32.mrb[0].mxu0
  %v255 = vpop.f32.mrb[0].mxu0
  %256 = vdwg.mxu0
  %vm257 = vcmask 31744
  %v258 = vsel %vm257, %v252, -inf
  %259 = vmax.xlane.f32.xlu0 %v258
  %v260 = vpop.xlane.xlu0 %259
  %v261 = vsub.f32 %v252, %v260
  %v262 = vmul.f32 %v261, 1.442695
  %v263 = vpow.pop %v262
  %v264 = vsel %vm257, %v263, 0.0
  %265 = vadd.xlane.f32.xlu0 %v264
  %v266 = vpop.xlane.xlu0 %265
  %v267 = vrcp.pop %v266
  %v268 = vmul.f32 %v263, %v267
  %269 = vst.msk [vmem:[%s2] sm:$0xff] %vm257, %v268
  // Predicated region
  $region10: #{tpu_custom_call.1} parent=0 // pred_check
    _
  $region11: #{tpu_custom_call.1} parent=0 // pred_check_branch
    %271 = sbr.rel (0) target = $region13
  $region12: #{tpu_custom_call.1} parent=0 // pred_region
    _
  $region13: #{tpu_custom_call.1} parent=0 // pred_fallthru
    _
  // Predicated region
  $region14: #{tpu_custom_call.1} parent=0 // pred_check
    _
  $region15: #{tpu_custom_call.1} parent=0 // pred_check_branch
    %273 = sbr.rel (0) target = $region17
  $region16: #{tpu_custom_call.1} parent=0 // pred_region
    _
  $region17: #{tpu_custom_call.1} parent=0 // pred_fallthru
    _

</llo_original>
